<compile_context>
chip_gen: v7x
topology: tpu7x:2x2x1
jax: 0.10.0
libtpu: 0.0.40
codegen_flags: <defaults>
</compile_context>

<pallas_src>
import math

import jax
import jax.numpy as jnp
from jax.experimental import pallas as pl
from jax.experimental.pallas import tpu as pltpu


def make_sinusoidal_pe(d_model: int, max_len: int = 256, dtype=jnp.float32):
    """Deterministic buffer init, identical to the PyTorch __init__ (odd d_model safe)."""
    position = jnp.arange(max_len, dtype=jnp.float32)[:, None]           # (max_len, 1)
    div_term = jnp.exp(
        jnp.arange(0, d_model, 2, dtype=jnp.float32) * (-math.log(10000.0) / d_model)
    )                                                                    # (ceil(d/2),)
    angles = position * div_term                                         # (max_len, ceil(d/2))
    pe = jnp.zeros((max_len, 1, d_model), dtype=jnp.float32)
    pe = pe.at[:, 0, 0::2].set(jnp.sin(angles))
    pe = pe.at[:, 0, 1::2].set(jnp.cos(angles[:, : d_model // 2]))       # guard odd d_model
    return pe.astype(dtype)


def _add_pe_kernel(x_ref, pe_ref, o_ref):
    """o = x + pe.

    x_ref / o_ref : (ts, B, D) tile   (lane axis = D, unmasked stores for D % 128 == 0)
    pe_ref        : (ts, 1, D) tile   (broadcast over the B sublane axis; no temps)
    """
    o_ref[...] = x_ref[...] + pe_ref[...]


def _vmem_capacity_bytes() -> int:
    """Physical VMEM per TensorCore (128 MiB on v5e/v6e, 64 MiB on v7x)."""
    try:
        cap = getattr(pltpu.get_tpu_info(), "vmem_capacity_bytes", None)
        if cap:
            return int(cap)
    except Exception:
        pass
    return 64 * 1024 * 1024   # conservative default (v7x per-TC)


def _choose_row_tile(S: int, B: int, D: int, itemsize: int, budget_bytes: int) -> int:
    """Rows per grid step.

    - dtype-aware sublane alignment (f32: 8, bf16: 16, int8/fp8: 32)
    - per-stage bytes (x tile + out tile + pe tile) stay within `budget_bytes`
    - at least ~8 grid steps whenever S allows (pipelining; v7x's 2 TCs)
    """
    align = max(8, 32 // max(itemsize, 1))
    row_bytes = (2 * B * D + D) * itemsize            # x + out + pe per row, per stage
    ts_budget = budget_bytes // max(row_bytes, 1)
    n_steps = min(8, max(1, S // align))              # target grid steps
    ts_steps = -(-S // n_steps)                       # ceil(S / n_steps)
    ts = min(ts_budget, ts_steps, 2048)
    ts = (ts // align) * align
    if ts <= 0 or ts >= S:
        return S                                      # full extent (exempt from 8-div rule)
    return ts


def positional_encoding_sinusoidal(x: jax.Array, pe: jax.Array, *, use_pallas=None) -> jax.Array:
    """Forward pass: x + pe[:x.shape[0]].   x: (S, B, D); pe: (max_len, 1, D)."""
    S, B, D = x.shape
    pe_s = pe[:S].astype(x.dtype)                     # (S, 1, D); same dtype on both paths

    if use_pallas is None:
        big_enough = x.size * x.dtype.itemsize >= (256 * 1024)
        lane_ok = D >= 128                            # lane width < 128 -> masked stores; let XLA fuse
        use_pallas = big_enough and lane_ok
    if not use_pallas:
        return x + pe_s

    vmem_cap = _vmem_capacity_bytes()
    budget = max(4 << 20, vmem_cap // 4)              # per pipeline stage (~32 MiB v5e/v6e, ~16 MiB v7x)
    ts = _choose_row_tile(S, B, D, x.dtype.itemsize, budget)
    grid = (pl.cdiv(S, ts),)

    tile_bytes = ts * (2 * B * D + D) * x.dtype.itemsize
    # Double-buffered tiles + headroom, capped at 3/4 of physical VMEM (48 MiB on v7x).
    vmem_limit = int(min(3 * vmem_cap // 4, max(32 << 20, 2 * tile_bytes + (4 << 20))))

    return pl.pallas_call(
        _add_pe_kernel,
        out_shape=jax.ShapeDtypeStruct((S, B, D), x.dtype),
        grid=grid,
        in_specs=[
            pl.BlockSpec((ts, B, D), lambda i: (i, 0, 0)),   # x tile
            pl.BlockSpec((ts, 1, D), lambda i: (i, 0, 0)),   # pe tile (1/B of x's HBM bytes)
        ],
        out_specs=pl.BlockSpec((ts, B, D), lambda i: (i, 0, 0)),
        # Pure elementwise with 1:1 block maps -> safe to reuse x's HBM buffer
        # (real in-place only when the caller jits + donates; otherwise XLA copies).
        input_output_aliases={0: 0},
        compiler_params=pltpu.CompilerParams(
            dimension_semantics=("parallel",),   # lets v7x shard the row grid across 2 TCs
            vmem_limit_bytes=vmem_limit,
        ),
    )(x, pe_s)


if __name__ == "__main__":
    max_len = 256
    key = jax.random.PRNGKey(0)
    key_a, key_b, key_c = jax.random.split(key, 3)

    # Lane-dense case: seq=8, batch=2, d_model=128 — goes through the Pallas kernel.
    seq, batch, d_model = 8, 2, 128
    pe = make_sinusoidal_pe(d_model, max_len)
    x = jax.random.normal(key_a, (seq, batch, d_model), dtype=jnp.float32)
    out = jax.block_until_ready(positional_encoding_sinusoidal(x, pe, use_pallas=True))
    ref = x + pe[:seq]
    assert out.shape == x.shape and out.dtype == x.dtype
    assert jnp.allclose(out, ref, atol=1e-6, rtol=1e-6)

    # Ragged seq (S % row tile != 0) still through Pallas — exercises edge padding.
    seq_r = 20
    x_r = jax.random.normal(key_b, (seq_r, batch, d_model), dtype=jnp.float32)
    out_r = jax.block_until_ready(positional_encoding_sinusoidal(x_r, pe, use_pallas=True))
    assert jnp.allclose(out_r, x_r + pe[:seq_r], atol=1e-6, rtol=1e-6)

    # Narrow case from the spec example (d_model=32): lane width < 128 -> heuristic
    # returns the XLA fused broadcast-add (a standalone Pallas call would lose here).
    d_small = 32
    pe_small = make_sinusoidal_pe(d_small, max_len)
    x_small = jax.random.normal(key_c, (seq, batch, d_small), dtype=jnp.float32)
    out_small = jax.block_until_ready(positional_encoding_sinusoidal(x_small, pe_small))
    assert jnp.allclose(out_small, x_small + pe_small[:seq], atol=1e-6, rtol=1e-6)

    print("KERNEL_OK")
</pallas_src>

<mosaic_0001>
module attributes {stable_mosaic.version = 11 : i64} {
  func.func @_add_pe_kernel(%arg0: i32, %arg1: memref<8x2x128xf32, #tpu.memory_space<vmem>>, %arg2: memref<8x1x128xf32, #tpu.memory_space<vmem>>, %arg3: memref<8x2x128xf32, #tpu.memory_space<vmem>>) attributes {dimension_semantics = [#tpu.dimension_semantics<parallel>], iteration_bounds = array<i64: 1>, scalar_prefetch = 0 : i64, scratch_operands = 0 : i64, tpu.core_type = #tpu.core_type<tc>, window_params = [{transform_indices = @transform_0, window_bounds = array<i64: 8, 2, 128>}, {transform_indices = @transform_1, window_bounds = array<i64: 8, 1, 128>}, {transform_indices = @transform_2, window_bounds = array<i64: 8, 2, 128>}]} {
    %c0 = arith.constant 0 : index
    %c0_0 = arith.constant 0 : index
    %c0_1 = arith.constant 0 : index
    %0 = vector.load %arg1[%c0, %c0_0, %c0_1] : memref<8x2x128xf32, #tpu.memory_space<vmem>>, vector<8x2x128xf32>
    %c0_2 = arith.constant 0 : index
    %c0_3 = arith.constant 0 : index
    %c0_4 = arith.constant 0 : index
    %1 = vector.load %arg2[%c0_2, %c0_3, %c0_4] : memref<8x1x128xf32, #tpu.memory_space<vmem>>, vector<8x1x128xf32>
    %2 = vector.broadcast %1 : vector<8x1x128xf32> to vector<8x2x128xf32>
    %3 = arith.addf %0, %2 : vector<8x2x128xf32>
    %c0_5 = arith.constant 0 : index
    %c0_6 = arith.constant 0 : index
    %c0_7 = arith.constant 0 : index
    %4 = vector.load %arg3[%c0_5, %c0_6, %c0_7] : memref<8x2x128xf32, #tpu.memory_space<vmem>>, vector<8x2x128xf32>
    tpu.vector_store %arg3[%c0_5, %c0_6, %c0_7], %3 {strides = array<i32>} : memref<8x2x128xf32, #tpu.memory_space<vmem>>, vector<8x2x128xf32>,
    return
  }
  func.func @transform_0(%arg0: i32) -> (i32, i32, i32) {
    %c0_i32 = arith.constant 0 : i32
    %c0_i32_0 = arith.constant 0 : i32
    %c0_i32_1 = arith.constant 0 : i32
    return %arg0, %c0_i32, %c0_i32_0 : i32, i32, i32
  }
  func.func @transform_1(%arg0: i32) -> (i32, i32, i32) {
    %c0_i32 = arith.constant 0 : i32
    %c0_i32_0 = arith.constant 0 : i32
    %c0_i32_1 = arith.constant 0 : i32
    return %arg0, %c0_i32, %c0_i32_0 : i32, i32, i32
  }
  func.func @transform_2(%arg0: i32) -> (i32, i32, i32) {
    %c0_i32 = arith.constant 0 : i32
    %c0_i32_0 = arith.constant 0 : i32
    %c0_i32_1 = arith.constant 0 : i32
    return %arg0, %c0_i32, %c0_i32_0 : i32, i32, i32
  }
}

</mosaic_0001>

<llo_original>
// kernel: tpu_custom_call.1
$region0: #{tpu_custom_call.1}
  #allocation0 [shape = 'u32[]', space=smem, size = 0x4, offset = 0x4, fixed_abs, tag = 'smem constant byte address 0x4 - core index']
  #allocation1 [shape = 'u32[144,128]{1,0:T(1,128)}', space=vmem, size = 0x12000, scoped, tag = 'internal scratch']
  %s0 = inlined_call_operand.hbm [shape: f32[8,2,128], index: 0, kind: input, shape index: {}, may-alias: {0,2}]
  %s1 = inlined_call_operand.vmem [shape: f32[8,1,128], index: 1, kind: input, shape index: {}]
  %s2 = inlined_call_operand.hbm [shape: f32[8,2,128], index: 2, kind: output, shape index: {}, may-alias: {0,2}]
  %s3 = sld [smem:[#allocation0]]
  $region22: #{tpu_custom_call.1} parent=0
    _
  %s5 = ssub.s32 1, %s3
  %s6 = scalar_select 0, %s5, %s3
  $region1: #{tpu_custom_call.1} parent=0
    #allocation2 [shape = 'u8[8192]{0}', space=vmem, size = 0x2000, scoped, tag = 'input window, operand 0, single buffered']
    #allocation3 [shape = 's32[1]{0}', space=sflag, size = 0x4, scoped, tag = 'scoped memory for tpu_custom_call.1']
    #allocation4 [shape = 's32[1]{0}', space=sflag, size = 0x4, scoped, tag = 'scoped memory for tpu_custom_call.1']
    #allocation5 [shape = 'u8[8192]{0}', space=vmem, size = 0x2000, scoped, tag = 'output window, operand 0, single buffered']
    %7 = vsyncpa [#allocation3], 0
    %8 = vsyncpa [#allocation4], 0
    // Predicated region
    $region2: #{tpu_custom_call.1} parent=1 // pred_check
      _
    $region3: #{tpu_custom_call.1} parent=1 // pred_check_branch
      %10 = sbr.rel (0) target = $region5
    $region4: #{tpu_custom_call.1} parent=1 // pred_region
      %s12 = ssub.s32 256, 256
      %13 = vsyncadd [#allocation3], %s12
      %s14 = sshll.u32 [#allocation2], 4
      %s15 = int_to_ptr.vmem [resolvable:$true] %s14
      %20 = dma.hbm_to_vmem [thread:$0]  %s0, 256, %s15, [#allocation3], 32, 32, 2
    $region5: #{tpu_custom_call.1} parent=1 // pred_fallthru
      _
    // Predicated region
    $region6: #{tpu_custom_call.1} parent=1 // pred_check
      _
    $region7: #{tpu_custom_call.1} parent=1 // pred_check_branch
      %22 = sbr.rel (0) target = $region9
    $region8: #{tpu_custom_call.1} parent=1 // pred_region
      _
    $region9: #{tpu_custom_call.1} parent=1 // pred_fallthru
      _
    // Predicated region
    $region10: #{tpu_custom_call.1} parent=1 // pred_check
      _
    $region11: #{tpu_custom_call.1} parent=1 // pred_check_branch
      %24 = sbr.rel (0) target = $region13
    $region12: #{tpu_custom_call.1} parent=1 // pred_region
      %25 = dma.done [#allocation3], 256
    $region13: #{tpu_custom_call.1} parent=1 // pred_fallthru
      _
    %v26 = vld [vmem:[#allocation2] sm:$0x3]
    %v27 = vld [vmem:[#allocation2 + $0x2] sm:$0x3]
    %v28 = vld [vmem:[#allocation2 + $0x4] sm:$0x3]
    %v29 = vld [vmem:[#allocation2 + $0x6] sm:$0x3]
    %v30 = vld [vmem:[#allocation2 + $0x8] sm:$0x3]
    %v31 = vld [vmem:[#allocation2 + $0xa] sm:$0x3]
    %v32 = vld [vmem:[#allocation2 + $0xc] sm:$0x3]
    %v33 = vld [vmem:[#allocation2 + $0xe] sm:$0x3]
    %v34 = vld [vmem:[%s1] sm:$0x1]
    %v35 = vld [vmem:[%s1 + $0x1] sm:$0x1]
    %v36 = vld [vmem:[%s1 + $0x2] sm:$0x1]
    %v37 = vld [vmem:[%s1 + $0x3] sm:$0x1]
    %v38 = vld [vmem:[%s1 + $0x4] sm:$0x1]
    %v39 = vld [vmem:[%s1 + $0x5] sm:$0x1]
    %v40 = vld [vmem:[%s1 + $0x6] sm:$0x1]
    %v41 = vld [vmem:[%s1 + $0x7] sm:$0x1]
    %v50 = vlaneseq
    %v51 = vshrl.u32 %v50, 7
    %v52 = vsub.s32 0, %v51
    %v53 = vrot.slane %v34, %v52
    %v54 = vlaneseq
    %v55 = vshrl.u32 %v54, 7
    %v56 = vsub.s32 0, %v55
    %v57 = vrot.slane %v35, %v56
    %v58 = vlaneseq
    %v59 = vshrl.u32 %v58, 7
    %v60 = vsub.s32 0, %v59
    %v61 = vrot.slane %v36, %v60
    %v62 = vlaneseq
    %v63 = vshrl.u32 %v62, 7
    %v64 = vsub.s32 0, %v63
    %v65 = vrot.slane %v37, %v64
    %v66 = vlaneseq
    %v67 = vshrl.u32 %v66, 7
    %v68 = vsub.s32 0, %v67
    %v69 = vrot.slane %v38, %v68
    %v70 = vlaneseq
    %v71 = vshrl.u32 %v70, 7
    %v72 = vsub.s32 0, %v71
    %v73 = vrot.slane %v39, %v72
    %v74 = vlaneseq
    %v75 = vshrl.u32 %v74, 7
    %v76 = vsub.s32 0, %v75
    %v77 = vrot.slane %v40, %v76
    %v78 = vlaneseq
    %v79 = vshrl.u32 %v78, 7
    %v80 = vsub.s32 0, %v79
    %v81 = vrot.slane %v41, %v80
    %v90 = vadd.f32 %v26, %v53
    %v91 = vadd.f32 %v27, %v57
    %v92 = vadd.f32 %v28, %v61
    %v93 = vadd.f32 %v29, %v65
    %v94 = vadd.f32 %v30, %v69
    %v95 = vadd.f32 %v31, %v73
    %v96 = vadd.f32 %v32, %v77
    %v97 = vadd.f32 %v33, %v81
    %98 = vst [vmem:[#allocation5] sm:$0x3] %v90
    %99 = vst [vmem:[#allocation5 + $0x2] sm:$0x3] %v91
    %100 = vst [vmem:[#allocation5 + $0x4] sm:$0x3] %v92
    %101 = vst [vmem:[#allocation5 + $0x6] sm:$0x3] %v93
    %102 = vst [vmem:[#allocation5 + $0x8] sm:$0x3] %v94
    %103 = vst [vmem:[#allocation5 + $0xa] sm:$0x3] %v95
    %104 = vst [vmem:[#allocation5 + $0xc] sm:$0x3] %v96
    %105 = vst [vmem:[#allocation5 + $0xe] sm:$0x3] %v97
    // Predicated region
    $region14: #{tpu_custom_call.1} parent=1 // pred_check
      _
    $region15: #{tpu_custom_call.1} parent=1 // pred_check_branch
      %107 = sbr.rel (0) target = $region17
    $region16: #{tpu_custom_call.1} parent=1 // pred_region
      %s109 = ssub.s32 256, 256
      %110 = vsyncadd [#allocation4], %s109
      %s111 = sshll.u32 [#allocation5], 4
      %s112 = int_to_ptr.vmem [resolvable:$true] %s111
      %117 = dma.vmem_to_hbm [thread:$0]  %s112, 256, %s2, [#allocation4], 32, 32, 2
    $region17: #{tpu_custom_call.1} parent=1 // pred_fallthru
      _
    // Predicated region
    $region18: #{tpu_custom_call.1} parent=1 // pred_check
      _
    $region19: #{tpu_custom_call.1} parent=1 // pred_check_branch
      %119 = sbr.rel (0) target = $region21
    $region20: #{tpu_custom_call.1} parent=1 // pred_region
      %120 = dma.done [#allocation4], 256
    $region21: #{tpu_custom_call.1} parent=1 // pred_fallthru
      _
    %121 = vsyncpa [#allocation3], 1
    %122 = vsyncpa [#allocation4], 1

</llo_original>
